<compile_context>
chip_gen: v5e
topology: v5e:2x2
jax: 0.10.0
libtpu: 0.0.40
codegen_flags: <defaults>
</compile_context>

<pallas_src>
import functools

import jax
import jax.numpy as jnp
from jax import lax
from jax.experimental import pallas as pl
from jax.experimental.pallas import tpu as pltpu

INPUT_SIZE = 64
HIDDEN = 128
NUM_CLASSES = 40
FC_PAD = 128   # fc output padded to a full 128-lane width (lane-dense stores)


def _rnn_classifier_kernel(pre0_ref, w1h_ref, w2i_ref, w2h_ref, b2_ref,
                           wfc_ref, bfc_ref, out_ref, h1_ref, h2_ref,
                           *, steps_per_block, seq_len, masked):
    t_blk = pl.program_id(1)
    bsz = out_ref.shape[0]

    @pl.when(t_blk == 0)
    def _():
        h1_ref[...] = jnp.zeros_like(h1_ref)
        h2_ref[...] = jnp.zeros_like(h2_ref)

    # Hoisted out of the step loop: single load + broadcast of the fused
    # layer-1 bias (JAX does not CSE broadcast_in_dim per unrolled step).
    b2 = jnp.broadcast_to(b2_ref[...], (bsz, HIDDEN))

    def step(u, carry):
        h1, h2 = carry
        # Precomputed layer-0 projection for this step, streamed from the
        # VMEM block (keeps vreg pressure flat regardless of U).
        pre0_u = pre0_ref[u]                                      # (bsz, H) f32
        h1_new = jnp.tanh(
            pre0_u
            + jnp.dot(h1.astype(w1h_ref.dtype), w1h_ref[...],
                      preferred_element_type=jnp.float32))
        h2_new = jnp.tanh(
            jnp.dot(h1_new.astype(w2i_ref.dtype), w2i_ref[...],
                    preferred_element_type=jnp.float32)
            + jnp.dot(h2.astype(w2h_ref.dtype), w2h_ref[...],
                      preferred_element_type=jnp.float32)
            + b2)
        if masked:
            # Only reached when T has no divisor <= max_u: single vselect per
            # state keeps padded steps from advancing the hidden state.
            valid = t_blk * steps_per_block + u < seq_len
            h1_new = jnp.where(valid, h1_new, h1)
            h2_new = jnp.where(valid, h2_new, h2)
        return h1_new, h2_new

    carry = (h1_ref[...], h2_ref[...])
    if steps_per_block <= 16:
        # Small blocks: full static unroll (max scheduler visibility).
        for u in range(steps_per_block):
            carry = step(u, carry)
    else:
        # Large blocks: partially-unrolled loop bounds traced code size and
        # vreg live ranges while keeping an overlap window for the scheduler.
        carry = lax.fori_loop(0, steps_per_block, step, carry, unroll=8)
    h1, h2 = carry

    h1_ref[...] = h1
    h2_ref[...] = h2

    # fc on the last step's top-layer hidden state; output is 128-lane padded
    # so the store is unmasked / lane-dense.
    @pl.when(t_blk == pl.num_programs(1) - 1)
    def _():
        out_ref[...] = (
            jnp.dot(h2.astype(wfc_ref.dtype), wfc_ref[...],
                    preferred_element_type=jnp.float32)
            + bfc_ref[...]).astype(out_ref.dtype)


def _pick_steps_per_block(T, max_u=64, min_u=8):
    """Prefer U = T or the largest divisor of T <= max_u (no masking needed);
    fall back to max_u with masked padded steps."""
    if T <= max_u:
        return T, False
    best = 1
    for d in range(1, max_u + 1):
        if T % d == 0:
            best = d
    if best >= min_u:
        return best, False
    return max_u, True


def _default_compute_dtype():
    """bf16 matmul operands on bf16-native MXUs (v6e/v7x), f32 otherwise."""
    kind = jax.devices()[0].device_kind.lower()
    if any(v in kind for v in ("v2", "v3", "v4", "v5")):
        return jnp.float32
    return jnp.bfloat16


def rnn_classifier_forward(x, params, *, compute_dtype=None,
                           max_steps_per_block=64):
    """x: (B, T, 64) float32, batch_first like the PyTorch module."""
    (w_ih0, w_hh0, b_ih0, b_hh0,
     w_ih1, w_hh1, b_ih1, b_hh1,
     w_fc, b_fc) = params
    if compute_dtype is None:
        compute_dtype = _default_compute_dtype()

    B, T, _ = x.shape
    assert T >= 1, "empty sequence: output would be undefined"

    U, masked = _pick_steps_per_block(T, max_steps_per_block)
    num_t_blocks = pl.cdiv(T, U)
    T_pad = num_t_blocks * U

    # Batch tiling: <=32 rows per block; a second block enables the parallel
    # grid axis to split across the two TensorCores on v7x.
    B_pad = max(8, ((B + 7) // 8) * 8)
    if B_pad <= 32:
        b_block = B_pad
    else:
        b_block = 32
        B_pad = ((B_pad + 31) // 32) * 32
    num_b_blocks = B_pad // b_block

    # Whole-sequence layer-0 input projection in XLA (off the serial chain);
    # the kernel input becomes lane-dense (last dim = 128). Kept f32 so the
    # bf16 path only affects the recurrent / fc weights.
    w1i = w_ih0.T.astype(compute_dtype)                           # (64, 128)
    b1 = (b_ih0 + b_hh0).astype(jnp.float32)                      # (128,)
    pre0 = (jnp.dot(x.reshape(B * T, INPUT_SIZE).astype(compute_dtype), w1i,
                    preferred_element_type=jnp.float32)
            + b1).reshape(B, T, HIDDEN)
    pre0 = jnp.transpose(pre0, (1, 0, 2))                         # (T, B, 128)
    pre0 = jnp.pad(pre0, ((0, T_pad - T), (0, B_pad - B), (0, 0)))

    # Remaining weights: (in, out) layout, fused layer-1 bias, fc zero-padded
    # to a 128-wide output.
    w1h = w_hh0.T.astype(compute_dtype)                           # (128, 128)
    w2i = w_ih1.T.astype(compute_dtype)                           # (128, 128)
    w2h = w_hh1.T.astype(compute_dtype)                           # (128, 128)
    b2 = (b_ih1 + b_hh1).reshape(1, HIDDEN).astype(jnp.float32)
    wfc = jnp.zeros((HIDDEN, FC_PAD), compute_dtype)
    wfc = wfc.at[:, :NUM_CLASSES].set(w_fc.T.astype(compute_dtype))
    bfc = jnp.zeros((1, FC_PAD), jnp.float32)
    bfc = bfc.at[:, :NUM_CLASSES].set(b_fc.astype(jnp.float32))

    kernel = functools.partial(
        _rnn_classifier_kernel,
        steps_per_block=U, seq_len=T, masked=masked)

    def const(shape):
        return pl.BlockSpec(shape, lambda bi, ti: (0,) * len(shape))

    weight_bytes = sum(int(a.size) * a.dtype.itemsize
                       for a in (w1h, w2i, w2h, b2, wfc, bfc))
    cost = pl.CostEstimate(
        flops=(2 * T_pad * B_pad * 3 * HIDDEN * HIDDEN
               + 2 * B_pad * HIDDEN * FC_PAD),
        transcendentals=2 * T_pad * B_pad * HIDDEN,
        bytes_accessed=(int(pre0.size) * 4 + weight_bytes
                        + B_pad * FC_PAD * 4),
    )

    out_pad = pl.pallas_call(
        kernel,
        out_shape=jax.ShapeDtypeStruct((B_pad, FC_PAD), jnp.float32),
        grid_spec=pltpu.PrefetchScalarGridSpec(
            num_scalar_prefetch=0,
            grid=(num_b_blocks, num_t_blocks),
            in_specs=[
                pl.BlockSpec((U, b_block, HIDDEN), lambda bi, ti: (ti, bi, 0)),
                const((HIDDEN, HIDDEN)),      # w1h
                const((HIDDEN, HIDDEN)),      # w2i
                const((HIDDEN, HIDDEN)),      # w2h
                const((1, HIDDEN)),           # b2
                const((HIDDEN, FC_PAD)),      # wfc
                const((1, FC_PAD)),           # bfc
            ],
            out_specs=pl.BlockSpec((b_block, FC_PAD), lambda bi, ti: (bi, 0)),
            scratch_shapes=[pltpu.VMEM((b_block, HIDDEN), jnp.float32),
                            pltpu.VMEM((b_block, HIDDEN), jnp.float32)],
        ),
        compiler_params=pltpu.CompilerParams(
            dimension_semantics=("parallel", "arbitrary")),
        cost_estimate=cost,
    )(pre0, w1h, w2i, w2h, b2, wfc, bfc)

    return out_pad[:B, :NUM_CLASSES]


def init_params(key):
    """Deterministic init matching the PyTorch parameter shapes
    (uniform(-1/sqrt(hidden), 1/sqrt(hidden)), like nn.RNN/nn.Linear)."""
    k = 1.0 / jnp.sqrt(jnp.float32(HIDDEN))
    keys = jax.random.split(key, 10)
    u = lambda kk, shape: jax.random.uniform(kk, shape, jnp.float32, -k, k)
    return (
        u(keys[0], (HIDDEN, INPUT_SIZE)),   # weight_ih_l0
        u(keys[1], (HIDDEN, HIDDEN)),       # weight_hh_l0
        u(keys[2], (HIDDEN,)),              # bias_ih_l0
        u(keys[3], (HIDDEN,)),              # bias_hh_l0
        u(keys[4], (HIDDEN, HIDDEN)),       # weight_ih_l1
        u(keys[5], (HIDDEN, HIDDEN)),       # weight_hh_l1
        u(keys[6], (HIDDEN,)),              # bias_ih_l1
        u(keys[7], (HIDDEN,)),              # bias_hh_l1
        u(keys[8], (NUM_CLASSES, HIDDEN)),  # fc.weight
        u(keys[9], (NUM_CLASSES,)),         # fc.bias
    )


def reference_forward(x, params):
    """Pure-JAX reference mirroring torch.nn.RNN(num_layers=2) + Linear."""
    (w_ih0, w_hh0, b_ih0, b_hh0,
     w_ih1, w_hh1, b_ih1, b_hh1, w_fc, b_fc) = params
    B = x.shape[0]
    h0 = jnp.zeros((B, HIDDEN), jnp.float32)

    def step(carry, xt):
        h1, h2 = carry
        h1 = jnp.tanh(xt @ w_ih0.T + b_ih0 + h1 @ w_hh0.T + b_hh0)
        h2 = jnp.tanh(h1 @ w_ih1.T + b_ih1 + h2 @ w_hh1.T + b_hh1)
        return (h1, h2), None

    (h1, h2), _ = lax.scan(step, (h0, h0), jnp.transpose(x, (1, 0, 2)))
    return h2 @ w_fc.T + b_fc


if __name__ == "__main__":
    key = jax.random.PRNGKey(0)
    kp, k1, k2, k3, k4 = jax.random.split(key, 5)
    params = init_params(kp)

    # Case 1: B=2, T=8 -> single block, full unroll, no masking.
    x1 = jax.random.normal(k1, (2, 8, INPUT_SIZE), jnp.float32)
    o1 = jax.block_until_ready(
        rnn_classifier_forward(x1, params, compute_dtype=jnp.float32))
    r1 = reference_forward(x1, params)
    assert o1.shape == (2, NUM_CLASSES)
    assert jnp.allclose(o1, r1, atol=1e-4, rtol=1e-4), (
        f"case1 max err {jnp.max(jnp.abs(o1 - r1))}")

    # Case 2: B=3, T=12 -> U=12 (divisor of T), no masking.
    x2 = jax.random.normal(k2, (3, 12, INPUT_SIZE), jnp.float32)
    o2 = jax.block_until_ready(
        rnn_classifier_forward(x2, params, compute_dtype=jnp.float32))
    r2 = reference_forward(x2, params)
    assert o2.shape == (3, NUM_CLASSES)
    assert jnp.allclose(o2, r2, atol=1e-4, rtol=1e-4), (
        f"case2 max err {jnp.max(jnp.abs(o2 - r2))}")

    # Case 3: B=40 (two 32-row batch blocks, parallel axis), T=67 (prime > 64
    # -> U=64, fori_loop path, masked padded steps, two time blocks).
    x3 = jax.random.normal(k3, (40, 67, INPUT_SIZE), jnp.float32)
    o3 = jax.block_until_ready(
        rnn_classifier_forward(x3, params, compute_dtype=jnp.float32))
    r3 = reference_forward(x3, params)
    assert o3.shape == (40, NUM_CLASSES)
    assert jnp.allclose(o3, r3, atol=5e-3, rtol=5e-3), (
        f"case3 max err {jnp.max(jnp.abs(o3 - r3))}")

    # Case 4: bf16 matmul operands (v6e/v7x fast path), relaxed tolerance.
    x4 = jax.random.normal(k4, (4, 16, INPUT_SIZE), jnp.float32)
    o4 = jax.block_until_ready(
        rnn_classifier_forward(x4, params, compute_dtype=jnp.bfloat16))
    r4 = reference_forward(x4, params)
    assert o4.shape == (4, NUM_CLASSES)
    assert jnp.max(jnp.abs(o4 - r4)) < 0.5, (
        f"case4 (bf16) max err {jnp.max(jnp.abs(o4 - r4))}")

    print("KERNEL_OK")
</pallas_src>

<mosaic_0001>
module attributes {stable_mosaic.version = 11 : i64} {
  func.func @_rnn_classifier_kernel(%arg0: i32, %arg1: i32, %arg2: memref<8x8x128xf32, #tpu.memory_space<vmem>>, %arg3: memref<128x128xf32, #tpu.memory_space<vmem>>, %arg4: memref<128x128xf32, #tpu.memory_space<vmem>>, %arg5: memref<128x128xf32, #tpu.memory_space<vmem>>, %arg6: memref<1x128xf32, #tpu.memory_space<vmem>>, %arg7: memref<128x128xf32, #tpu.memory_space<vmem>>, %arg8: memref<1x128xf32, #tpu.memory_space<vmem>>, %arg9: memref<8x128xf32, #tpu.memory_space<vmem>>, %arg10: memref<8x128xf32, #tpu.memory_space<vmem>>, %arg11: memref<8x128xf32, #tpu.memory_space<vmem>>) attributes {dimension_semantics = [#tpu.dimension_semantics<parallel>, #tpu.dimension_semantics<arbitrary>], iteration_bounds = array<i64: 1, 1>, scalar_prefetch = 0 : i64, scratch_operands = 2 : i64, tpu.core_type = #tpu.core_type<tc>, window_params = [{transform_indices = @transform_0, window_bounds = array<i64: 8, 8, 128>}, {pipeline_mode = #tpu.pipeline_mode<synchronous>, transform_indices = @transform_1, window_bounds = array<i64: 128, 128>}, {pipeline_mode = #tpu.pipeline_mode<synchronous>, transform_indices = @transform_2, window_bounds = array<i64: 128, 128>}, {pipeline_mode = #tpu.pipeline_mode<synchronous>, transform_indices = @transform_3, window_bounds = array<i64: 128, 128>}, {pipeline_mode = #tpu.pipeline_mode<synchronous>, transform_indices = @transform_4, window_bounds = array<i64: 1, 128>}, {pipeline_mode = #tpu.pipeline_mode<synchronous>, transform_indices = @transform_5, window_bounds = array<i64: 128, 128>}, {pipeline_mode = #tpu.pipeline_mode<synchronous>, transform_indices = @transform_6, window_bounds = array<i64: 1, 128>}, {transform_indices = @transform_7, window_bounds = array<i64: 8, 128>}]} {
    %c0_i32 = arith.constant 0 : i32
    %0 = arith.cmpi eq, %arg1, %c0_i32 : i32
    %1 = arith.extui %0 : i1 to i32
    %c0_i32_0 = arith.constant 0 : i32
    %2 = arith.cmpi ne, %1, %c0_i32_0 : i32
    scf.if %2 {
      %cst_100 = arith.constant 0.000000e+00 : f32
      %117 = vector.broadcast %cst_100 : f32 to vector<8x128xf32>
      %c0_101 = arith.constant 0 : index
      %c0_102 = arith.constant 0 : index
      %118 = vector.load %arg10[%c0_101, %c0_102] : memref<8x128xf32, #tpu.memory_space<vmem>>, vector<8x128xf32>
      tpu.vector_store %arg10[%c0_101, %c0_102], %117 {strides = array<i32>} : memref<8x128xf32, #tpu.memory_space<vmem>>, vector<8x128xf32>,
      %cst_103 = arith.constant 0.000000e+00 : f32
      %119 = vector.broadcast %cst_103 : f32 to vector<8x128xf32>
      %c0_104 = arith.constant 0 : index
      %c0_105 = arith.constant 0 : index
      %120 = vector.load %arg11[%c0_104, %c0_105] : memref<8x128xf32, #tpu.memory_space<vmem>>, vector<8x128xf32>
      tpu.vector_store %arg11[%c0_104, %c0_105], %119 {strides = array<i32>} : memref<8x128xf32, #tpu.memory_space<vmem>>, vector<8x128xf32>,
    } else {
    }
    %c0 = arith.constant 0 : index
    %c0_1 = arith.constant 0 : index
    %3 = vector.load %arg6[%c0, %c0_1] : memref<1x128xf32, #tpu.memory_space<vmem>>, vector<1x128xf32>
    %4 = vector.shape_cast %3 : vector<1x128xf32> to vector<1x128xf32>
    %5 = vector.broadcast %4 : vector<1x128xf32> to vector<8x128xf32>
    %c0_2 = arith.constant 0 : index
    %c0_3 = arith.constant 0 : index
    %6 = vector.load %arg10[%c0_2, %c0_3] : memref<8x128xf32, #tpu.memory_space<vmem>>, vector<8x128xf32>
    %c0_4 = arith.constant 0 : index
    %c0_5 = arith.constant 0 : index
    %7 = vector.load %arg11[%c0_4, %c0_5] : memref<8x128xf32, #tpu.memory_space<vmem>>, vector<8x128xf32>
    %c0_6 = arith.constant 0 : index
    %c0_7 = arith.constant 0 : index
    %c0_8 = arith.constant 0 : index
    %8 = vector.load %arg2[%c0_6, %c0_7, %c0_8] : memref<8x8x128xf32, #tpu.memory_space<vmem>>, vector<1x8x128xf32>
    %9 = vector.shape_cast %8 : vector<1x8x128xf32> to vector<8x128xf32>
    %c0_9 = arith.constant 0 : index
    %c0_10 = arith.constant 0 : index
    %10 = vector.load %arg3[%c0_9, %c0_10] : memref<128x128xf32, #tpu.memory_space<vmem>>, vector<128x128xf32>
    %cst = arith.constant dense<0.000000e+00> : vector<8x128xf32>
    %11 = tpu.matmul %6, %10, %cst {dimension_numbers = #tpu.dot_dimension_numbers<[1], [0], [0], [1], [0, 0, 1, 1], [], []>} : vector<8x128xf32>, vector<128x128xf32>, vector<8x128xf32> -> vector<8x128xf32>
    %12 = arith.addf %9, %11 : vector<8x128xf32>
    %13 = math.tanh %12 : vector<8x128xf32>
    %c0_11 = arith.constant 0 : index
    %c0_12 = arith.constant 0 : index
    %14 = vector.load %arg4[%c0_11, %c0_12] : memref<128x128xf32, #tpu.memory_space<vmem>>, vector<128x128xf32>
    %cst_13 = arith.constant dense<0.000000e+00> : vector<8x128xf32>
    %15 = tpu.matmul %13, %14, %cst_13 {dimension_numbers = #tpu.dot_dimension_numbers<[1], [0], [0], [1], [0, 0, 1, 1], [], []>} : vector<8x128xf32>, vector<128x128xf32>, vector<8x128xf32> -> vector<8x128xf32>
    %c0_14 = arith.constant 0 : index
    %c0_15 = arith.constant 0 : index
    %16 = vector.load %arg5[%c0_14, %c0_15] : memref<128x128xf32, #tpu.memory_space<vmem>>, vector<128x128xf32>
    %cst_16 = arith.constant dense<0.000000e+00> : vector<8x128xf32>
    %17 = tpu.matmul %7, %16, %cst_16 {dimension_numbers = #tpu.dot_dimension_numbers<[1], [0], [0], [1], [0, 0, 1, 1], [], []>} : vector<8x128xf32>, vector<128x128xf32>, vector<8x128xf32> -> vector<8x128xf32>
    %18 = arith.addf %15, %17 : vector<8x128xf32>
    %19 = arith.addf %18, %5 : vector<8x128xf32>
    %20 = math.tanh %19 : vector<8x128xf32>
    %c1 = arith.constant 1 : index
    %c0_17 = arith.constant 0 : index
    %c0_18 = arith.constant 0 : index
    %21 = vector.load %arg2[%c1, %c0_17, %c0_18] : memref<8x8x128xf32, #tpu.memory_space<vmem>>, vector<1x8x128xf32>
    %22 = vector.shape_cast %21 : vector<1x8x128xf32> to vector<8x128xf32>
    %c0_19 = arith.constant 0 : index
    %c0_20 = arith.constant 0 : index
    %23 = vector.load %arg3[%c0_19, %c0_20] : memref<128x128xf32, #tpu.memory_space<vmem>>, vector<128x128xf32>
    %cst_21 = arith.constant dense<0.000000e+00> : vector<8x128xf32>
    %24 = tpu.matmul %13, %23, %cst_21 {dimension_numbers = #tpu.dot_dimension_numbers<[1], [0], [0], [1], [0, 0, 1, 1], [], []>} : vector<8x128xf32>, vector<128x128xf32>, vector<8x128xf32> -> vector<8x128xf32>
    %25 = arith.addf %22, %24 : vector<8x128xf32>
    %26 = math.tanh %25 : vector<8x128xf32>
    %c0_22 = arith.constant 0 : index
    %c0_23 = arith.constant 0 : index
    %27 = vector.load %arg4[%c0_22, %c0_23] : memref<128x128xf32, #tpu.memory_space<vmem>>, vector<128x128xf32>
    %cst_24 = arith.constant dense<0.000000e+00> : vector<8x128xf32>
    %28 = tpu.matmul %26, %27, %cst_24 {dimension_numbers = #tpu.dot_dimension_numbers<[1], [0], [0], [1], [0, 0, 1, 1], [], []>} : vector<8x128xf32>, vector<128x128xf32>, vector<8x128xf32> -> vector<8x128xf32>
    %c0_25 = arith.constant 0 : index
    %c0_26 = arith.constant 0 : index
    %29 = vector.load %arg5[%c0_25, %c0_26] : memref<128x128xf32, #tpu.memory_space<vmem>>, vector<128x128xf32>
    %cst_27 = arith.constant dense<0.000000e+00> : vector<8x128xf32>
    %30 = tpu.matmul %20, %29, %cst_27 {dimension_numbers = #tpu.dot_dimension_numbers<[1], [0], [0], [1], [0, 0, 1, 1], [], []>} : vector<8x128xf32>, vector<128x128xf32>, vector<8x128xf32> -> vector<8x128xf32>
    %31 = arith.addf %28, %30 : vector<8x128xf32>
    %32 = arith.addf %31, %5 : vector<8x128xf32>
    %33 = math.tanh %32 : vector<8x128xf32>
    %c2 = arith.constant 2 : index
    %c0_28 = arith.constant 0 : index
    %c0_29 = arith.constant 0 : index
    %34 = vector.load %arg2[%c2, %c0_28, %c0_29] : memref<8x8x128xf32, #tpu.memory_space<vmem>>, vector<1x8x128xf32>
    %35 = vector.shape_cast %34 : vector<1x8x128xf32> to vector<8x128xf32>
    %c0_30 = arith.constant 0 : index
    %c0_31 = arith.constant 0 : index
    %36 = vector.load %arg3[%c0_30, %c0_31] : memref<128x128xf32, #tpu.memory_space<vmem>>, vector<128x128xf32>
    %cst_32 = arith.constant dense<0.000000e+00> : vector<8x128xf32>
    %37 = tpu.matmul %26, %36, %cst_32 {dimension_numbers = #tpu.dot_dimension_numbers<[1], [0], [0], [1], [0, 0, 1, 1], [], []>} : vector<8x128xf32>, vector<128x128xf32>, vector<8x128xf32> -> vector<8x128xf32>
    %38 = arith.addf %35, %37 : vector<8x128xf32>
    %39 = math.tanh %38 : vector<8x128xf32>
    %c0_33 = arith.constant 0 : index
    %c0_34 = arith.constant 0 : index
    %40 = vector.load %arg4[%c0_33, %c0_34] : memref<128x128xf32, #tpu.memory_space<vmem>>, vector<128x128xf32>
    %cst_35 = arith.constant dense<0.000000e+00> : vector<8x128xf32>
    %41 = tpu.matmul %39, %40, %cst_35 {dimension_numbers = #tpu.dot_dimension_numbers<[1], [0], [0], [1], [0, 0, 1, 1], [], []>} : vector<8x128xf32>, vector<128x128xf32>, vector<8x128xf32> -> vector<8x128xf32>
    %c0_36 = arith.constant 0 : index
    %c0_37 = arith.constant 0 : index
    %42 = vector.load %arg5[%c0_36, %c0_37] : memref<128x128xf32, #tpu.memory_space<vmem>>, vector<128x128xf32>
    %cst_38 = arith.constant dense<0.000000e+00> : vector<8x128xf32>
    %43 = tpu.matmul %33, %42, %cst_38 {dimension_numbers = #tpu.dot_dimension_numbers<[1], [0], [0], [1], [0, 0, 1, 1], [], []>} : vector<8x128xf32>, vector<128x128xf32>, vector<8x128xf32> -> vector<8x128xf32>
    %44 = arith.addf %41, %43 : vector<8x128xf32>
    %45 = arith.addf %44, %5 : vector<8x128xf32>
    %46 = math.tanh %45 : vector<8x128xf32>
    %c3 = arith.constant 3 : index
    %c0_39 = arith.constant 0 : index
    %c0_40 = arith.constant 0 : index
    %47 = vector.load %arg2[%c3, %c0_39, %c0_40] : memref<8x8x128xf32, #tpu.memory_space<vmem>>, vector<1x8x128xf32>
    %48 = vector.shape_cast %47 : vector<1x8x128xf32> to vector<8x128xf32>
    %c0_41 = arith.constant 0 : index
    %c0_42 = arith.constant 0 : index
    %49 = vector.load %arg3[%c0_41, %c0_42] : memref<128x128xf32, #tpu.memory_space<vmem>>, vector<128x128xf32>
    %cst_43 = arith.constant dense<0.000000e+00> : vector<8x128xf32>
    %50 = tpu.matmul %39, %49, %cst_43 {dimension_numbers = #tpu.dot_dimension_numbers<[1], [0], [0], [1], [0, 0, 1, 1], [], []>} : vector<8x128xf32>, vector<128x128xf32>, vector<8x128xf32> -> vector<8x128xf32>
    %51 = arith.addf %48, %50 : vector<8x128xf32>
    %52 = math.tanh %51 : vector<8x128xf32>
    %c0_44 = arith.constant 0 : index
    %c0_45 = arith.constant 0 : index
    %53 = vector.load %arg4[%c0_44, %c0_45] : memref<128x128xf32, #tpu.memory_space<vmem>>, vector<128x128xf32>
    %cst_46 = arith.constant dense<0.000000e+00> : vector<8x128xf32>
    %54 = tpu.matmul %52, %53, %cst_46 {dimension_numbers = #tpu.dot_dimension_numbers<[1], [0], [0], [1], [0, 0, 1, 1], [], []>} : vector<8x128xf32>, vector<128x128xf32>, vector<8x128xf32> -> vector<8x128xf32>
    %c0_47 = arith.constant 0 : index
    %c0_48 = arith.constant 0 : index
    %55 = vector.load %arg5[%c0_47, %c0_48] : memref<128x128xf32, #tpu.memory_space<vmem>>, vector<128x128xf32>
    %cst_49 = arith.constant dense<0.000000e+00> : vector<8x128xf32>
    %56 = tpu.matmul %46, %55, %cst_49 {dimension_numbers = #tpu.dot_dimension_numbers<[1], [0], [0], [1], [0, 0, 1, 1], [], []>} : vector<8x128xf32>, vector<128x128xf32>, vector<8x128xf32> -> vector<8x128xf32>
    %57 = arith.addf %54, %56 : vector<8x128xf32>
    %58 = arith.addf %57, %5 : vector<8x128xf32>
    %59 = math.tanh %58 : vector<8x128xf32>
    %c4 = arith.constant 4 : index
    %c0_50 = arith.constant 0 : index
    %c0_51 = arith.constant 0 : index
    %60 = vector.load %arg2[%c4, %c0_50, %c0_51] : memref<8x8x128xf32, #tpu.memory_space<vmem>>, vector<1x8x128xf32>
    %61 = vector.shape_cast %60 : vector<1x8x128xf32> to vector<8x128xf32>
    %c0_52 = arith.constant 0 : index
    %c0_53 = arith.constant 0 : index
    %62 = vector.load %arg3[%c0_52, %c0_53] : memref<128x128xf32, #tpu.memory_space<vmem>>, vector<128x128xf32>
    %cst_54 = arith.constant dense<0.000000e+00> : vector<8x128xf32>
    %63 = tpu.matmul %52, %62, %cst_54 {dimension_numbers = #tpu.dot_dimension_numbers<[1], [0], [0], [1], [0, 0, 1, 1], [], []>} : vector<8x128xf32>, vector<128x128xf32>, vector<8x128xf32> -> vector<8x128xf32>
    %64 = arith.addf %61, %63 : vector<8x128xf32>
    %65 = math.tanh %64 : vector<8x128xf32>
    %c0_55 = arith.constant 0 : index
    %c0_56 = arith.constant 0 : index
    %66 = vector.load %arg4[%c0_55, %c0_56] : memref<128x128xf32, #tpu.memory_space<vmem>>, vector<128x128xf32>
    %cst_57 = arith.constant dense<0.000000e+00> : vector<8x128xf32>
    %67 = tpu.matmul %65, %66, %cst_57 {dimension_numbers = #tpu.dot_dimension_numbers<[1], [0], [0], [1], [0, 0, 1, 1], [], []>} : vector<8x128xf32>, vector<128x128xf32>, vector<8x128xf32> -> vector<8x128xf32>
    %c0_58 = arith.constant 0 : index
    %c0_59 = arith.constant 0 : index
    %68 = vector.load %arg5[%c0_58, %c0_59] : memref<128x128xf32, #tpu.memory_space<vmem>>, vector<128x128xf32>
    %cst_60 = arith.constant dense<0.000000e+00> : vector<8x128xf32>
    %69 = tpu.matmul %59, %68, %cst_60 {dimension_numbers = #tpu.dot_dimension_numbers<[1], [0], [0], [1], [0, 0, 1, 1], [], []>} : vector<8x128xf32>, vector<128x128xf32>, vector<8x128xf32> -> vector<8x128xf32>
    %70 = arith.addf %67, %69 : vector<8x128xf32>
    %71 = arith.addf %70, %5 : vector<8x128xf32>
    %72 = math.tanh %71 : vector<8x128xf32>
    %c5 = arith.constant 5 : index
    %c0_61 = arith.constant 0 : index
    %c0_62 = arith.constant 0 : index
    %73 = vector.load %arg2[%c5, %c0_61, %c0_62] : memref<8x8x128xf32, #tpu.memory_space<vmem>>, vector<1x8x128xf32>
    %74 = vector.shape_cast %73 : vector<1x8x128xf32> to vector<8x128xf32>
    %c0_63 = arith.constant 0 : index
    %c0_64 = arith.constant 0 : index
    %75 = vector.load %arg3[%c0_63, %c0_64] : memref<128x128xf32, #tpu.memory_space<vmem>>, vector<128x128xf32>
    %cst_65 = arith.constant dense<0.000000e+00> : vector<8x128xf32>
    %76 = tpu.matmul %65, %75, %cst_65 {dimension_numbers = #tpu.dot_dimension_numbers<[1], [0], [0], [1], [0, 0, 1, 1], [], []>} : vector<8x128xf32>, vector<128x128xf32>, vector<8x128xf32> -> vector<8x128xf32>
    %77 = arith.addf %74, %76 : vector<8x128xf32>
    %78 = math.tanh %77 : vector<8x128xf32>
    %c0_66 = arith.constant 0 : index
    %c0_67 = arith.constant 0 : index
    %79 = vector.load %arg4[%c0_66, %c0_67] : memref<128x128xf32, #tpu.memory_space<vmem>>, vector<128x128xf32>
    %cst_68 = arith.constant dense<0.000000e+00> : vector<8x128xf32>
    %80 = tpu.matmul %78, %79, %cst_68 {dimension_numbers = #tpu.dot_dimension_numbers<[1], [0], [0], [1], [0, 0, 1, 1], [], []>} : vector<8x128xf32>, vector<128x128xf32>, vector<8x128xf32> -> vector<8x128xf32>
    %c0_69 = arith.constant 0 : index
    %c0_70 = arith.constant 0 : index
    %81 = vector.load %arg5[%c0_69, %c0_70] : memref<128x128xf32, #tpu.memory_space<vmem>>, vector<128x128xf32>
    %cst_71 = arith.constant dense<0.000000e+00> : vector<8x128xf32>
    %82 = tpu.matmul %72, %81, %cst_71 {dimension_numbers = #tpu.dot_dimension_numbers<[1], [0], [0], [1], [0, 0, 1, 1], [], []>} : vector<8x128xf32>, vector<128x128xf32>, vector<8x128xf32> -> vector<8x128xf32>
    %83 = arith.addf %80, %82 : vector<8x128xf32>
    %84 = arith.addf %83, %5 : vector<8x128xf32>
    %85 = math.tanh %84 : vector<8x128xf32>
    %c6 = arith.constant 6 : index
    %c0_72 = arith.constant 0 : index
    %c0_73 = arith.constant 0 : index
    %86 = vector.load %arg2[%c6, %c0_72, %c0_73] : memref<8x8x128xf32, #tpu.memory_space<vmem>>, vector<1x8x128xf32>
    %87 = vector.shape_cast %86 : vector<1x8x128xf32> to vector<8x128xf32>
    %c0_74 = arith.constant 0 : index
    %c0_75 = arith.constant 0 : index
    %88 = vector.load %arg3[%c0_74, %c0_75] : memref<128x128xf32, #tpu.memory_space<vmem>>, vector<128x128xf32>
    %cst_76 = arith.constant dense<0.000000e+00> : vector<8x128xf32>
    %89 = tpu.matmul %78, %88, %cst_76 {dimension_numbers = #tpu.dot_dimension_numbers<[1], [0], [0], [1], [0, 0, 1, 1], [], []>} : vector<8x128xf32>, vector<128x128xf32>, vector<8x128xf32> -> vector<8x128xf32>
    %90 = arith.addf %87, %89 : vector<8x128xf32>
    %91 = math.tanh %90 : vector<8x128xf32>
    %c0_77 = arith.constant 0 : index
    %c0_78 = arith.constant 0 : index
    %92 = vector.load %arg4[%c0_77, %c0_78] : memref<128x128xf32, #tpu.memory_space<vmem>>, vector<128x128xf32>
    %cst_79 = arith.constant dense<0.000000e+00> : vector<8x128xf32>
    %93 = tpu.matmul %91, %92, %cst_79 {dimension_numbers = #tpu.dot_dimension_numbers<[1], [0], [0], [1], [0, 0, 1, 1], [], []>} : vector<8x128xf32>, vector<128x128xf32>, vector<8x128xf32> -> vector<8x128xf32>
    %c0_80 = arith.constant 0 : index
    %c0_81 = arith.constant 0 : index
    %94 = vector.load %arg5[%c0_80, %c0_81] : memref<128x128xf32, #tpu.memory_space<vmem>>, vector<128x128xf32>
    %cst_82 = arith.constant dense<0.000000e+00> : vector<8x128xf32>
    %95 = tpu.matmul %85, %94, %cst_82 {dimension_numbers = #tpu.dot_dimension_numbers<[1], [0], [0], [1], [0, 0, 1, 1], [], []>} : vector<8x128xf32>, vector<128x128xf32>, vector<8x128xf32> -> vector<8x128xf32>
    %96 = arith.addf %93, %95 : vector<8x128xf32>
    %97 = arith.addf %96, %5 : vector<8x128xf32>
    %98 = math.tanh %97 : vector<8x128xf32>
    %c7 = arith.constant 7 : index
    %c0_83 = arith.constant 0 : index
    %c0_84 = arith.constant 0 : index
    %99 = vector.load %arg2[%c7, %c0_83, %c0_84] : memref<8x8x128xf32, #tpu.memory_space<vmem>>, vector<1x8x128xf32>
    %100 = vector.shape_cast %99 : vector<1x8x128xf32> to vector<8x128xf32>
    %c0_85 = arith.constant 0 : index
    %c0_86 = arith.constant 0 : index
    %101 = vector.load %arg3[%c0_85, %c0_86] : memref<128x128xf32, #tpu.memory_space<vmem>>, vector<128x128xf32>
    %cst_87 = arith.constant dense<0.000000e+00> : vector<8x128xf32>
    %102 = tpu.matmul %91, %101, %cst_87 {dimension_numbers = #tpu.dot_dimension_numbers<[1], [0], [0], [1], [0, 0, 1, 1], [], []>} : vector<8x128xf32>, vector<128x128xf32>, vector<8x128xf32> -> vector<8x128xf32>
    %103 = arith.addf %100, %102 : vector<8x128xf32>
    %104 = math.tanh %103 : vector<8x128xf32>
    %c0_88 = arith.constant 0 : index
    %c0_89 = arith.constant 0 : index
    %105 = vector.load %arg4[%c0_88, %c0_89] : memref<128x128xf32, #tpu.memory_space<vmem>>, vector<128x128xf32>
    %cst_90 = arith.constant dense<0.000000e+00> : vector<8x128xf32>
    %106 = tpu.matmul %104, %105, %cst_90 {dimension_numbers = #tpu.dot_dimension_numbers<[1], [0], [0], [1], [0, 0, 1, 1], [], []>} : vector<8x128xf32>, vector<128x128xf32>, vector<8x128xf32> -> vector<8x128xf32>
    %c0_91 = arith.constant 0 : index
    %c0_92 = arith.constant 0 : index
    %107 = vector.load %arg5[%c0_91, %c0_92] : memref<128x128xf32, #tpu.memory_space<vmem>>, vector<128x128xf32>
    %cst_93 = arith.constant dense<0.000000e+00> : vector<8x128xf32>
    %108 = tpu.matmul %98, %107, %cst_93 {dimension_numbers = #tpu.dot_dimension_numbers<[1], [0], [0], [1], [0, 0, 1, 1], [], []>} : vector<8x128xf32>, vector<128x128xf32>, vector<8x128xf32> -> vector<8x128xf32>
    %109 = arith.addf %106, %108 : vector<8x128xf32>
    %110 = arith.addf %109, %5 : vector<8x128xf32>
    %111 = math.tanh %110 : vector<8x128xf32>
    %c0_94 = arith.constant 0 : index
    %c0_95 = arith.constant 0 : index
    %112 = vector.load %arg10[%c0_94, %c0_95] : memref<8x128xf32, #tpu.memory_space<vmem>>, vector<8x128xf32>
    tpu.vector_store %arg10[%c0_94, %c0_95], %104 {strides = array<i32>} : memref<8x128xf32, #tpu.memory_space<vmem>>, vector<8x128xf32>,
    %c0_96 = arith.constant 0 : index
    %c0_97 = arith.constant 0 : index
    %113 = vector.load %arg11[%c0_96, %c0_97] : memref<8x128xf32, #tpu.memory_space<vmem>>, vector<8x128xf32>
    tpu.vector_store %arg11[%c0_96, %c0_97], %111 {strides = array<i32>} : memref<8x128xf32, #tpu.memory_space<vmem>>, vector<8x128xf32>,
    %c0_i32_98 = arith.constant 0 : i32
    %114 = arith.cmpi eq, %arg1, %c0_i32_98 : i32
    %115 = arith.extui %114 : i1 to i32
    %c0_i32_99 = arith.constant 0 : i32
    %116 = arith.cmpi ne, %115, %c0_i32_99 : i32
    scf.if %116 {
      %c0_100 = arith.constant 0 : index
      %c0_101 = arith.constant 0 : index
      %117 = vector.load %arg7[%c0_100, %c0_101] : memref<128x128xf32, #tpu.memory_space<vmem>>, vector<128x128xf32>
      %cst_102 = arith.constant dense<0.000000e+00> : vector<8x128xf32>
      %118 = tpu.matmul %111, %117, %cst_102 {dimension_numbers = #tpu.dot_dimension_numbers<[1], [0], [0], [1], [0, 0, 1, 1], [], []>} : vector<8x128xf32>, vector<128x128xf32>, vector<8x128xf32> -> vector<8x128xf32>
      %c0_103 = arith.constant 0 : index
      %c0_104 = arith.constant 0 : index
      %119 = vector.load %arg8[%c0_103, %c0_104] : memref<1x128xf32, #tpu.memory_space<vmem>>, vector<1x128xf32>
      %120 = vector.broadcast %119 : vector<1x128xf32> to vector<8x128xf32>
      %121 = arith.addf %118, %120 : vector<8x128xf32>
      %c0_105 = arith.constant 0 : index
      %c0_106 = arith.constant 0 : index
      %122 = vector.load %arg9[%c0_105, %c0_106] : memref<8x128xf32, #tpu.memory_space<vmem>>, vector<8x128xf32>
      tpu.vector_store %arg9[%c0_105, %c0_106], %121 {strides = array<i32>} : memref<8x128xf32, #tpu.memory_space<vmem>>, vector<8x128xf32>,
    } else {
    }
    return
  }
  func.func @transform_0(%arg0: i32, %arg1: i32) -> (i32, i32, i32) {
    %c0_i32 = arith.constant 0 : i32
    %c0_i32_0 = arith.constant 0 : i32
    return %arg1, %arg0, %c0_i32 : i32, i32, i32
  }
  func.func @transform_1(%arg0: i32, %arg1: i32) -> (i32, i32) {
    %c0_i32 = arith.constant 0 : i32
    %c0_i32_0 = arith.constant 0 : i32
    %c0_i32_1 = arith.constant 0 : i32
    return %c0_i32, %c0_i32_0 : i32, i32
  }
  func.func @transform_2(%arg0: i32, %arg1: i32) -> (i32, i32) {
    %c0_i32 = arith.constant 0 : i32
    %c0_i32_0 = arith.constant 0 : i32
    %c0_i32_1 = arith.constant 0 : i32
    return %c0_i32, %c0_i32_0 : i32, i32
  }
  func.func @transform_3(%arg0: i32, %arg1: i32) -> (i32, i32) {
    %c0_i32 = arith.constant 0 : i32
    %c0_i32_0 = arith.constant 0 : i32
    %c0_i32_1 = arith.constant 0 : i32
    return %c0_i32, %c0_i32_0 : i32, i32
  }
  func.func @transform_4(%arg0: i32, %arg1: i32) -> (i32, i32) {
    %c0_i32 = arith.constant 0 : i32
    %c0_i32_0 = arith.constant 0 : i32
    %c0_i32_1 = arith.constant 0 : i32
    return %c0_i32, %c0_i32_0 : i32, i32
  }
  func.func @transform_5(%arg0: i32, %arg1: i32) -> (i32, i32) {
    %c0_i32 = arith.constant 0 : i32
    %c0_i32_0 = arith.constant 0 : i32
    %c0_i32_1 = arith.constant 0 : i32
    return %c0_i32, %c0_i32_0 : i32, i32
  }
  func.func @transform_6(%arg0: i32, %arg1: i32) -> (i32, i32) {
    %c0_i32 = arith.constant 0 : i32
    %c0_i32_0 = arith.constant 0 : i32
    %c0_i32_1 = arith.constant 0 : i32
    return %c0_i32, %c0_i32_0 : i32, i32
  }
  func.func @transform_7(%arg0: i32, %arg1: i32) -> (i32, i32) {
    %c0_i32 = arith.constant 0 : i32
    %c0_i32_0 = arith.constant 0 : i32
    return %arg0, %c0_i32 : i32, i32
  }
}

</mosaic_0001>

<llo_original>
// kernel: tpu_custom_call.1
$region0: #{tpu_custom_call.1}
  #allocation0 [shape = 'u32[]', space=smem, size = 0x4, offset = 0x4, fixed_abs, tag = 'smem constant byte address 0x4 - core index']
  #allocation1 [shape = 'u32[72,128]{1,0:T(1,128)}', space=vmem, size = 0x9000, scoped, tag = 'internal scratch']
  #allocation2 [shape = 'f32[8,128]{1,0:T(8,128)}', space=vmem, size = 0x1000, scoped, tag = 'scratch operand']
  #allocation3 [shape = 'f32[8,128]{1,0:T(8,128)}', space=vmem, size = 0x1000, scoped, tag = 'scratch operand']
  %s0 = inlined_call_operand.hbm [shape: f32[8,8,128], index: 0, kind: input, shape index: {}]
  %s1 = inlined_call_operand.hbm [shape: f32[128,128], index: 1, kind: input, shape index: {}]
  %s2 = inlined_call_operand.hbm [shape: f32[128,128], index: 2, kind: input, shape index: {}]
  %s3 = inlined_call_operand.hbm [shape: f32[128,128], index: 3, kind: input, shape index: {}]
  %s4 = inlined_call_operand.vmem [shape: f32[1,128], index: 4, kind: input, shape index: {}]
  %s5 = inlined_call_operand.hbm [shape: f32[128,128], index: 5, kind: input, shape index: {}]
  %s6 = inlined_call_operand.vmem [shape: f32[1,128], index: 6, kind: input, shape index: {}]
  %s7 = inlined_call_operand.hbm [shape: f32[8,128], index: 7, kind: output, shape index: {}]
  %s8 = sld [smem:[#allocation0]]
  $region66: #{tpu_custom_call.1} parent=0
    _
  %s10 = ssub.s32 1, %s8
  %s11 = scalar_select 0, %s10, %s8
  $region1: #{tpu_custom_call.1} parent=0
    #allocation4 [shape = 'u8[32768]{0}', space=vmem, size = 0x8000, scoped, tag = 'input window, operand 0, single buffered']
    #allocation5 [shape = 's32[1]{0}', space=sflag, size = 0x4, scoped, tag = 'scoped memory for tpu_custom_call.1']
    #allocation6 [shape = 's32[1]{0}', space=sflag, size = 0x4, scoped, tag = 'scoped memory for tpu_custom_call.1']
    #allocation7 [shape = 'u8[65536]{0}', space=vmem, size = 0x10000, scoped, tag = 'input window, operand 1, single buffered']
    #allocation8 [shape = 's32[1]{0}', space=sflag, size = 0x4, scoped, tag = 'scoped memory for tpu_custom_call.1']
    #allocation9 [shape = 'u8[65536]{0}', space=vmem, size = 0x10000, scoped, tag = 'input window, operand 2, single buffered']
    #allocation10 [shape = 'u8[65536]{0}', space=vmem, size = 0x10000, scoped, tag = 'input window, operand 3, single buffered']
    #allocation11 [shape = 's32[1]{0}', space=sflag, size = 0x4, scoped, tag = 'scoped memory for tpu_custom_call.1']
    #allocation12 [shape = 'u8[65536]{0}', space=vmem, size = 0x10000, scoped, tag = 'input window, operand 5, single buffered']
    #allocation13 [shape = 'u8[4096]{0}', space=vmem, size = 0x1000, scoped, tag = 'output window, operand 0, single buffered']
    %12 = vsyncpa [#allocation5], 0
    %13 = vsyncpa [#allocation8], 0
    %14 = vsyncpa [#allocation11], 0
    %15 = vsyncpa [#allocation6], 0
    // Predicated region
    $region2: #{tpu_custom_call.1} parent=1 // pred_check
      _
    $region3: #{tpu_custom_call.1} parent=1 // pred_check_branch
      %17 = sbr.rel (0) target = $region5
    $region4: #{tpu_custom_call.1} parent=1 // pred_region
      %19 = vsyncadd [#allocation5], 0
      %s20 = sshll.u32 %s0, 4
      %s21 = int_to_ptr.hbm [resolvable:$true] %s20
      %s22 = sshll.u32 [#allocation4], 4
      %s23 = int_to_ptr.vmem [resolvable:$true] %s22
      %28 = dma.hbm_to_vmem [thread:$0]  %s21, 1024, %s23, [#allocation5], 128, 128, 8
    $region5: #{tpu_custom_call.1} parent=1 // pred_fallthru
      _
    // Predicated region
    $region6: #{tpu_custom_call.1} parent=1 // pred_check
      _
    $region7: #{tpu_custom_call.1} parent=1 // pred_check_branch
      %30 = sbr.rel (0) target = $region9
    $region8: #{tpu_custom_call.1} parent=1 // pred_region
      %32 = vsyncadd [#allocation8], 0
      %s33 = sshll.u32 %s1, 4
      %s34 = int_to_ptr.hbm [resolvable:$true] %s33
      %s35 = sshll.u32 [#allocation7], 4
      %s36 = int_to_ptr.vmem [resolvable:$true] %s35
      %41 = dma.hbm_to_vmem [thread:$0]  %s34, 2048, %s36, [#allocation8], 128, 128, 8
    $region9: #{tpu_custom_call.1} parent=1 // pred_fallthru
      _
    // Predicated region
    $region10: #{tpu_custom_call.1} parent=1 // pred_check
      _
    $region11: #{tpu_custom_call.1} parent=1 // pred_check_branch
      %43 = sbr.rel (0) target = $region13
    $region12: #{tpu_custom_call.1} parent=1 // pred_region
      %45 = vsyncadd [#allocation8], 0
      %s46 = sshll.u32 %s2, 4
      %s47 = int_to_ptr.hbm [resolvable:$true] %s46
      %s48 = sshll.u32 [#allocation9], 4
      %s49 = int_to_ptr.vmem [resolvable:$true] %s48
      %54 = dma.hbm_to_vmem [thread:$0]  %s47, 2048, %s49, [#allocation8], 128, 128, 8
    $region13: #{tpu_custom_call.1} parent=1 // pred_fallthru
      _
    // Predicated region
    $region14: #{tpu_custom_call.1} parent=1 // pred_check
      _
    $region15: #{tpu_custom_call.1} parent=1 // pred_check_branch
      %56 = sbr.rel (0) target = $region17
    $region16: #{tpu_custom_call.1} parent=1 // pred_region
      %58 = vsyncadd [#allocation11], 0
      %s59 = sshll.u32 %s3, 4
      %s60 = int_to_ptr.hbm [resolvable:$true] %s59
      %s61 = sshll.u32 [#allocation10], 4
      %s62 = int_to_ptr.vmem [resolvable:$true] %s61
      %67 = dma.hbm_to_vmem [thread:$0]  %s60, 2048, %s62, [#allocation11], 128, 128, 8
    $region17: #{tpu_custom_call.1} parent=1 // pred_fallthru
      _
    // Predicated region
    $region18: #{tpu_custom_call.1} parent=1 // pred_check
      _
    $region19: #{tpu_custom_call.1} parent=1 // pred_check_branch
      %69 = sbr.rel (0) target = $region21
    $region20: #{tpu_custom_call.1} parent=1 // pred_region
      _
    $region21: #{tpu_custom_call.1} parent=1 // pred_fallthru
      _
    // Predicated region
    $region22: #{tpu_custom_call.1} parent=1 // pred_check
      _
    $region23: #{tpu_custom_call.1} parent=1 // pred_check_branch
      %71 = sbr.rel (0) target = $region25
    $region24: #{tpu_custom_call.1} parent=1 // pred_region
      %73 = vsyncadd [#allocation11], 0
      %s74 = sshll.u32 %s5, 4
      %s75 = int_to_ptr.hbm [resolvable:$true] %s74
      %s76 = sshll.u32 [#allocation12], 4
      %s77 = int_to_ptr.vmem [resolvable:$true] %s76
      %82 = dma.hbm_to_vmem [thread:$0]  %s75, 2048, %s77, [#allocation11], 128, 128, 8
    $region25: #{tpu_custom_call.1} parent=1 // pred_fallthru
      _
    // Predicated region
    $region26: #{tpu_custom_call.1} parent=1 // pred_check
      _
    $region27: #{tpu_custom_call.1} parent=1 // pred_check_branch
      %84 = sbr.rel (0) target = $region29
    $region28: #{tpu_custom_call.1} parent=1 // pred_region
      _
    $region29: #{tpu_custom_call.1} parent=1 // pred_fallthru
      _
    // Predicated region
    $region30: #{tpu_custom_call.1} parent=1 // pred_check
      _
    $region31: #{tpu_custom_call.1} parent=1 // pred_check_branch
      %86 = sbr.rel (0) target = $region33
    $region32: #{tpu_custom_call.1} parent=1 // pred_region
      %88 = dma.done [#allocation5], 1024
    $region33: #{tpu_custom_call.1} parent=1 // pred_fallthru
      _
    // Predicated region
    $region34: #{tpu_custom_call.1} parent=1 // pred_check
      _
    $region35: #{tpu_custom_call.1} parent=1 // pred_check_branch
      %90 = sbr.rel (0) target = $region37
    $region36: #{tpu_custom_call.1} parent=1 // pred_region
      %92 = dma.done [#allocation8], 2048
    $region37: #{tpu_custom_call.1} parent=1 // pred_fallthru
      _
    // Predicated region
    $region38: #{tpu_custom_call.1} parent=1 // pred_check
      _
    $region39: #{tpu_custom_call.1} parent=1 // pred_check_branch
      %94 = sbr.rel (0) target = $region41
    $region40: #{tpu_custom_call.1} parent=1 // pred_region
      %96 = dma.done [#allocation8], 2048
    $region41: #{tpu_custom_call.1} parent=1 // pred_fallthru
      _
    // Predicated region
    $region42: #{tpu_custom_call.1} parent=1 // pred_check
      _
    $region43: #{tpu_custom_call.1} parent=1 // pred_check_branch
      %98 = sbr.rel (0) target = $region45
    $region44: #{tpu_custom_call.1} parent=1 // pred_region
      %100 = dma.done [#allocation11], 2048
    $region45: #{tpu_custom_call.1} parent=1 // pred_fallthru
      _
    // Predicated region
    $region46: #{tpu_custom_call.1} parent=1 // pred_check
      _
    $region47: #{tpu_custom_call.1} parent=1 // pred_check_branch
      %102 = sbr.rel (0) target = $region49
    $region48: #{tpu_custom_call.1} parent=1 // pred_region
      %104 = dma.done [#allocation11], 2048
    $region49: #{tpu_custom_call.1} parent=1 // pred_fallthru
      _
    %p105 = scmp.eq.s32.totalorder 0, 0
    // Predicated region
    $region50: #{tpu_custom_call.1} parent=1 // pred_check
      %p106 = pneg %p105
    $region51: #{tpu_custom_call.1} parent=1 // pred_check_branch
      %108 = sbr.rel (%p106) target = $region53
    $region52: #{tpu_custom_call.1} parent=1 // pred_region
      %109 = vst [vmem:[#allocation2] sm:$0xff] 0.0
      %110 = vst [vmem:[#allocation3] sm:$0xff] 0.0
    $region53: #{tpu_custom_call.1} parent=1 // pred_fallthru
      _
    %v111 = vld [vmem:[%s4] sm:$0x1]
    %v113 = vperm.slane %v111, 0
    %v115 = vld [vmem:[#allocation2] sm:$0xff]
    %v116 = vld [vmem:[#allocation3] sm:$0xff]
    %v117 = vld [vmem:[#allocation4] sm:$0xff]
    %v118 = vld [vmem:[#allocation7] sm:$0xff]
    %v119 = vld [vmem:[#allocation7 + $0x8] sm:$0xff]
    %v120 = vld [vmem:[#allocation7 + $0x10] sm:$0xff]
    %v121 = vld [vmem:[#allocation7 + $0x18] sm:$0xff]
    %v122 = vld [vmem:[#allocation7 + $0x20] sm:$0xff]
    %v123 = vld [vmem:[#allocation7 + $0x28] sm:$0xff]
    %v124 = vld [vmem:[#allocation7 + $0x30] sm:$0xff]
    %v125 = vld [vmem:[#allocation7 + $0x38] sm:$0xff]
    %v126 = vld [vmem:[#allocation7 + $0x40] sm:$0xff]
    %v127 = vld [vmem:[#allocation7 + $0x48] sm:$0xff]
    %v128 = vld [vmem:[#allocation7 + $0x50] sm:$0xff]
    %v129 = vld [vmem:[#allocation7 + $0x58] sm:$0xff]
    %v130 = vld [vmem:[#allocation7 + $0x60] sm:$0xff]
    %v131 = vld [vmem:[#allocation7 + $0x68] sm:$0xff]
    %v132 = vld [vmem:[#allocation7 + $0x70] sm:$0xff]
    %v133 = vld [vmem:[#allocation7 + $0x78] sm:$0xff]
    %134 = vmatpush.msra.mxu0 %v133
    %135 = vmatpush.msra.mxu0 %v132
    %136 = vmatpush.msra.mxu0 %v131
    %137 = vmatpush.msra.mxu0 %v130
    %138 = vmatpush.msra.mxu0 %v129
    %139 = vmatpush.msra.mxu0 %v128
    %140 = vmatpush.msra.mxu0 %v127
    %141 = vmatpush.msra.mxu0 %v126
    %142 = vmatpush.msra.mxu0 %v125
    %143 = vmatpush.msra.mxu0 %v124
    %144 = vmatpush.msra.mxu0 %v123
    %145 = vmatpush.msra.mxu0 %v122
    %146 = vmatpush.msra.mxu0 %v121
    %147 = vmatpush.msra.mxu0 %v120
    %148 = vmatpush.msra.mxu0 %v119
    %149 = vmatpush.msra.mxu0 %v118
    %150 = vmatmul.f32.gmra.mxu0 %v115
    %v151 = vpop.f32.mrf.mxu0
    %v152 = vadd.f32 0.0, %v151
    %153 = vdwg.mxu0
    %v154 = vadd.f32 %v117, %v152
    %v155 = vtanh.pop %v154
    %v156 = vld [vmem:[#allocation9] sm:$0xff]
    %v157 = vld [vmem:[#allocation9 + $0x8] sm:$0xff]
    %v158 = vld [vmem:[#allocation9 + $0x10] sm:$0xff]
    %v159 = vld [vmem:[#allocation9 + $0x18] sm:$0xff]
    %v160 = vld [vmem:[#allocation9 + $0x20] sm:$0xff]
    %v161 = vld [vmem:[#allocation9 + $0x28] sm:$0xff]
    %v162 = vld [vmem:[#allocation9 + $0x30] sm:$0xff]
    %v163 = vld [vmem:[#allocation9 + $0x38] sm:$0xff]
    %v164 = vld [vmem:[#allocation9 + $0x40] sm:$0xff]
    %v165 = vld [vmem:[#allocation9 + $0x48] sm:$0xff]
    %v166 = vld [vmem:[#allocation9 + $0x50] sm:$0xff]
    %v167 = vld [vmem:[#allocation9 + $0x58] sm:$0xff]
    %v168 = vld [vmem:[#allocation9 + $0x60] sm:$0xff]
    %v169 = vld [vmem:[#allocation9 + $0x68] sm:$0xff]
    %v170 = vld [vmem:[#allocation9 + $0x70] sm:$0xff]
    %v171 = vld [vmem:[#allocation9 + $0x78] sm:$0xff]
    %v172 = vld [vmem:[#allocation10] sm:$0xff]
    %v173 = vld [vmem:[#allocation10 + $0x8] sm:$0xff]
    %v174 = vld [vmem:[#allocation10 + $0x10] sm:$0xff]
    %v175 = vld [vmem:[#allocation10 + $0x18] sm:$0xff]
    %v176 = vld [vmem:[#allocation10 + $0x20] sm:$0xff]
    %v177 = vld [vmem:[#allocation10 + $0x28] sm:$0xff]
    %v178 = vld [vmem:[#allocation10 + $0x30] sm:$0xff]
    %v179 = vld [vmem:[#allocation10 + $0x38] sm:$0xff]
    %v180 = vld [vmem:[#allocation10 + $0x40] sm:$0xff]
    %v181 = vld [vmem:[#allocation10 + $0x48] sm:$0xff]
    %v182 = vld [vmem:[#allocation10 + $0x50] sm:$0xff]
    %v183 = vld [vmem:[#allocation10 + $0x58] sm:$0xff]
    %v184 = vld [vmem:[#allocation10 + $0x60] sm:$0xff]
    %v185 = vld [vmem:[#allocation10 + $0x68] sm:$0xff]
    %v186 = vld [vmem:[#allocation10 + $0x70] sm:$0xff]
    %v187 = vld [vmem:[#allocation10 + $0x78] sm:$0xff]
    %188 = vmatpush.msra.mxu0 %v187
    %189 = vmatpush.msra.mxu0 %v186
    %190 = vmatpush.msra.mxu0 %v185
    %191 = vmatpush.msra.mxu0 %v184
    %192 = vmatpush.msra.mxu0 %v183
    %193 = vmatpush.msra.mxu0 %v182
    %194 = vmatpush.msra.mxu0 %v181
    %195 = vmatpush.msra.mxu0 %v180
    %196 = vmatpush.msra.mxu0 %v179
    %197 = vmatpush.msra.mxu0 %v178
    %198 = vmatpush.msra.mxu0 %v177
    %199 = vmatpush.msra.mxu0 %v176
    %200 = vmatpush.msra.mxu0 %v175
    %201 = vmatpush.msra.mxu0 %v174
    %202 = vmatpush.msra.mxu0 %v173
    %203 = vmatpush.msra.mxu0 %v172
    %204 = vmatmul.f32.gmra.mxu0 %v116
    %v205 = vpop.f32.mrf.mxu0
    %v206 = vadd.f32 0.0, %v205
    %207 = vdwg.mxu0
    %208 = vmatpush.msra.mxu0 %v171
    %209 = vmatpush.msra.mxu0 %v170
    %210 = vmatpush.msra.mxu0 %v169
    %211 = vmatpush.msra.mxu0 %v168
    %212 = vmatpush.msra.mxu0 %v167
    %213 = vmatpush.msra.mxu0 %v166
    %214 = vmatpush.msra.mxu0 %v165
    %215 = vmatpush.msra.mxu0 %v164
    %216 = vmatpush.msra.mxu0 %v163
    %217 = vmatpush.msra.mxu0 %v162
    %218 = vmatpush.msra.mxu0 %v161
    %219 = vmatpush.msra.mxu0 %v160
    %220 = vmatpush.msra.mxu0 %v159
    %221 = vmatpush.msra.mxu0 %v158
    %222 = vmatpush.msra.mxu0 %v157
    %223 = vmatpush.msra.mxu0 %v156
    %224 = vmatmul.f32.gmra.mxu0 %v155
    %v225 = vpop.f32.mrf.mxu0
    %v226 = vadd.f32 %v206, %v225
    %227 = vdwg.mxu0
    %v228 = vadd.f32 %v226, %v113
    %v229 = vtanh.pop %v228
    %s230 = scalar_lea.vmem [#allocation4], 8
    %v231 = vld [vmem:[%s230] sm:$0xff]
    %232 = vmatpush.msra.mxu0 %v133
    %233 = vmatpush.msra.mxu0 %v132
    %234 = vmatpush.msra.mxu0 %v131
    %235 = vmatpush.msra.mxu0 %v130
    %236 = vmatpush.msra.mxu0 %v129
    %237 = vmatpush.msra.mxu0 %v128
    %238 = vmatpush.msra.mxu0 %v127
    %239 = vmatpush.msra.mxu0 %v126
    %240 = vmatpush.msra.mxu0 %v125
    %241 = vmatpush.msra.mxu0 %v124
    %242 = vmatpush.msra.mxu0 %v123
    %243 = vmatpush.msra.mxu0 %v122
    %244 = vmatpush.msra.mxu0 %v121
    %245 = vmatpush.msra.mxu0 %v120
    %246 = vmatpush.msra.mxu0 %v119
    %247 = vmatpush.msra.mxu0 %v118
    %248 = vmatmul.f32.gmra.mxu0 %v155
    %v249 = vpop.f32.mrf.mxu0
    %v250 = vadd.f32 0.0, %v249
    %251 = vdwg.mxu0
    %v252 = vadd.f32 %v231, %v250
    %v253 = vtanh.pop %v252
    %254 = vmatpush.msra.mxu0 %v187
    %255 = vmatpush.msra.mxu0 %v186
    %256 = vmatpush.msra.mxu0 %v185
    %257 = vmatpush.msra.mxu0 %v184
    %258 = vmatpush.msra.mxu0 %v183
    %259 = vmatpush.msra.mxu0 %v182
    %260 = vmatpush.msra.mxu0 %v181
    %261 = vmatpush.msra.mxu0 %v180
    %262 = vmatpush.msra.mxu0 %v179
    %263 = vmatpush.msra.mxu0 %v178
    %264 = vmatpush.msra.mxu0 %v177
    %265 = vmatpush.msra.mxu0 %v176
    %266 = vmatpush.msra.mxu0 %v175
    %267 = vmatpush.msra.mxu0 %v174
    %268 = vmatpush.msra.mxu0 %v173
    %269 = vmatpush.msra.mxu0 %v172
    %270 = vmatmul.f32.gmra.mxu0 %v229
    %v271 = vpop.f32.mrf.mxu0
    %v272 = vadd.f32 0.0, %v271
    %273 = vdwg.mxu0
    %274 = vmatpush.msra.mxu0 %v171
    %275 = vmatpush.msra.mxu0 %v170
    %276 = vmatpush.msra.mxu0 %v169
    %277 = vmatpush.msra.mxu0 %v168
    %278 = vmatpush.msra.mxu0 %v167
    %279 = vmatpush.msra.mxu0 %v166
    %280 = vmatpush.msra.mxu0 %v165
    %281 = vmatpush.msra.mxu0 %v164
    %282 = vmatpush.msra.mxu0 %v163
    %283 = vmatpush.msra.mxu0 %v162
    %284 = vmatpush.msra.mxu0 %v161
    %285 = vmatpush.msra.mxu0 %v160
    %286 = vmatpush.msra.mxu0 %v159
    %287 = vmatpush.msra.mxu0 %v158
    %288 = vmatpush.msra.mxu0 %v157
    %289 = vmatpush.msra.mxu0 %v156
    %290 = vmatmul.f32.gmra.mxu0 %v253
    %v291 = vpop.f32.mrf.mxu0
    %v292 = vadd.f32 %v272, %v291
    %293 = vdwg.mxu0
    %v294 = vadd.f32 %v292, %v113
    %v295 = vtanh.pop %v294
    %s296 = scalar_lea.vmem [#allocation4], 16
    %v297 = vld [vmem:[%s296] sm:$0xff]
    %298 = vmatpush.msra.mxu0 %v133
    %299 = vmatpush.msra.mxu0 %v132
    %300 = vmatpush.msra.mxu0 %v131
    %301 = vmatpush.msra.mxu0 %v130
    %302 = vmatpush.msra.mxu0 %v129
    %303 = vmatpush.msra.mxu0 %v128
    %304 = vmatpush.msra.mxu0 %v127
    %305 = vmatpush.msra.mxu0 %v126
    %306 = vmatpush.msra.mxu0 %v125
    %307 = vmatpush.msra.mxu0 %v124
    %308 = vmatpush.msra.mxu0 %v123
    %309 = vmatpush.msra.mxu0 %v122
    %310 = vmatpush.msra.mxu0 %v121
    %311 = vmatpush.msra.mxu0 %v120
    %312 = vmatpush.msra.mxu0 %v119
    %313 = vmatpush.msra.mxu0 %v118
    %314 = vmatmul.f32.gmra.mxu0 %v253
    %v315 = vpop.f32.mrf.mxu0
    %v316 = vadd.f32 0.0, %v315
    %317 = vdwg.mxu0
    %v318 = vadd.f32 %v297, %v316
    %v319 = vtanh.pop %v318
    %320 = vmatpush.msra.mxu0 %v187
    %321 = vmatpush.msra.mxu0 %v186
    %322 = vmatpush.msra.mxu0 %v185
    %323 = vmatpush.msra.mxu0 %v184
    %324 = vmatpush.msra.mxu0 %v183
    %325 = vmatpush.msra.mxu0 %v182
    %326 = vmatpush.msra.mxu0 %v181
    %327 = vmatpush.msra.mxu0 %v180
    %328 = vmatpush.msra.mxu0 %v179
    %329 = vmatpush.msra.mxu0 %v178
    %330 = vmatpush.msra.mxu0 %v177
    %331 = vmatpush.msra.mxu0 %v176
    %332 = vmatpush.msra.mxu0 %v175
    %333 = vmatpush.msra.mxu0 %v174
    %334 = vmatpush.msra.mxu0 %v173
    %335 = vmatpush.msra.mxu0 %v172
    %336 = vmatmul.f32.gmra.mxu0 %v295
    %v337 = vpop.f32.mrf.mxu0
    %v338 = vadd.f32 0.0, %v337
    %339 = vdwg.mxu0
    %340 = vmatpush.msra.mxu0 %v171
    %341 = vmatpush.msra.mxu0 %v170
    %342 = vmatpush.msra.mxu0 %v169
    %343 = vmatpush.msra.mxu0 %v168
    %344 = vmatpush.msra.mxu0 %v167
    %345 = vmatpush.msra.mxu0 %v166
    %346 = vmatpush.msra.mxu0 %v165
    %347 = vmatpush.msra.mxu0 %v164
    %348 = vmatpush.msra.mxu0 %v163
    %349 = vmatpush.msra.mxu0 %v162
    %350 = vmatpush.msra.mxu0 %v161
    %351 = vmatpush.msra.mxu0 %v160
    %352 = vmatpush.msra.mxu0 %v159
    %353 = vmatpush.msra.mxu0 %v158
    %354 = vmatpush.msra.mxu0 %v157
    %355 = vmatpush.msra.mxu0 %v156
    %356 = vmatmul.f32.gmra.mxu0 %v319
    %v357 = vpop.f32.mrf.mxu0
    %v358 = vadd.f32 %v338, %v357
    %359 = vdwg.mxu0
    %v360 = vadd.f32 %v358, %v113
    %v361 = vtanh.pop %v360
    %s362 = scalar_lea.vmem [#allocation4], 24
    %v363 = vld [vmem:[%s362] sm:$0xff]
    %364 = vmatpush.msra.mxu0 %v133
    %365 = vmatpush.msra.mxu0 %v132
    %366 = vmatpush.msra.mxu0 %v131
    %367 = vmatpush.msra.mxu0 %v130
    %368 = vmatpush.msra.mxu0 %v129
    %369 = vmatpush.msra.mxu0 %v128
    %370 = vmatpush.msra.mxu0 %v127
    %371 = vmatpush.msra.mxu0 %v126
    %372 = vmatpush.msra.mxu0 %v125
    %373 = vmatpush.msra.mxu0 %v124
    %374 = vmatpush.msra.mxu0 %v123
    %375 = vmatpush.msra.mxu0 %v122
    %376 = vmatpush.msra.mxu0 %v121
    %377 = vmatpush.msra.mxu0 %v120
    %378 = vmatpush.msra.mxu0 %v119
    %379 = vmatpush.msra.mxu0 %v118
    %380 = vmatmul.f32.gmra.mxu0 %v319
    %v381 = vpop.f32.mrf.mxu0
    %v382 = vadd.f32 0.0, %v381
    %383 = vdwg.mxu0
    %v384 = vadd.f32 %v363, %v382
    %v385 = vtanh.pop %v384
    %386 = vmatpush.msra.mxu0 %v187
    %387 = vmatpush.msra.mxu0 %v186
    %388 = vmatpush.msra.mxu0 %v185
    %389 = vmatpush.msra.mxu0 %v184
    %390 = vmatpush.msra.mxu0 %v183
    %391 = vmatpush.msra.mxu0 %v182
    %392 = vmatpush.msra.mxu0 %v181
    %393 = vmatpush.msra.mxu0 %v180
    %394 = vmatpush.msra.mxu0 %v179
    %395 = vmatpush.msra.mxu0 %v178
    %396 = vmatpush.msra.mxu0 %v177
    %397 = vmatpush.msra.mxu0 %v176
    %398 = vmatpush.msra.mxu0 %v175
    %399 = vmatpush.msra.mxu0 %v174
    %400 = vmatpush.msra.mxu0 %v173
    %401 = vmatpush.msra.mxu0 %v172
    %402 = vmatmul.f32.gmra.mxu0 %v361
    %v403 = vpop.f32.mrf.mxu0
    %v404 = vadd.f32 0.0, %v403
    %405 = vdwg.mxu0
    %406 = vmatpush.msra.mxu0 %v171
    %407 = vmatpush.msra.mxu0 %v170
    %408 = vmatpush.msra.mxu0 %v169
    %409 = vmatpush.msra.mxu0 %v168
    %410 = vmatpush.msra.mxu0 %v167
    %411 = vmatpush.msra.mxu0 %v166
    %412 = vmatpush.msra.mxu0 %v165
    %413 = vmatpush.msra.mxu0 %v164
    %414 = vmatpush.msra.mxu0 %v163
    %415 = vmatpush.msra.mxu0 %v162
    %416 = vmatpush.msra.mxu0 %v161
    %417 = vmatpush.msra.mxu0 %v160
    %418 = vmatpush.msra.mxu0 %v159
    %419 = vmatpush.msra.mxu0 %v158
    %420 = vmatpush.msra.mxu0 %v157
    %421 = vmatpush.msra.mxu0 %v156
    %422 = vmatmul.f32.gmra.mxu0 %v385
    %v423 = vpop.f32.mrf.mxu0
    %v424 = vadd.f32 %v404, %v423
    %425 = vdwg.mxu0
    %v426 = vadd.f32 %v424, %v113
    %v427 = vtanh.pop %v426
    %s428 = scalar_lea.vmem [#allocation4], 32
    %v429 = vld [vmem:[%s428] sm:$0xff]
    %430 = vmatpush.msra.mxu0 %v133
    %431 = vmatpush.msra.mxu0 %v132
    %432 = vmatpush.msra.mxu0 %v131
    %433 = vmatpush.msra.mxu0 %v130
    %434 = vmatpush.msra.mxu0 %v129
    %435 = vmatpush.msra.mxu0 %v128
    %436 = vmatpush.msra.mxu0 %v127
    %437 = vmatpush.msra.mxu0 %v126
    %438 = vmatpush.msra.mxu0 %v125
    %439 = vmatpush.msra.mxu0 %v124
    %440 = vmatpush.msra.mxu0 %v123
    %441 = vmatpush.msra.mxu0 %v122
    %442 = vmatpush.msra.mxu0 %v121
    %443 = vmatpush.msra.mxu0 %v120
    %444 = vmatpush.msra.mxu0 %v119
    %445 = vmatpush.msra.mxu0 %v118
    %446 = vmatmul.f32.gmra.mxu0 %v385
    %v447 = vpop.f32.mrf.mxu0
    %v448 = vadd.f32 0.0, %v447
    %449 = vdwg.mxu0
    %v450 = vadd.f32 %v429, %v448
    %v451 = vtanh.pop %v450
    %452 = vmatpush.msra.mxu0 %v187
    %453 = vmatpush.msra.mxu0 %v186
    %454 = vmatpush.msra.mxu0 %v185
    %455 = vmatpush.msra.mxu0 %v184
    %456 = vmatpush.msra.mxu0 %v183
    %457 = vmatpush.msra.mxu0 %v182
    %458 = vmatpush.msra.mxu0 %v181
    %459 = vmatpush.msra.mxu0 %v180
    %460 = vmatpush.msra.mxu0 %v179
    %461 = vmatpush.msra.mxu0 %v178
    %462 = vmatpush.msra.mxu0 %v177
    %463 = vmatpush.msra.mxu0 %v176
    %464 = vmatpush.msra.mxu0 %v175
    %465 = vmatpush.msra.mxu0 %v174
    %466 = vmatpush.msra.mxu0 %v173
    %467 = vmatpush.msra.mxu0 %v172
    %468 = vmatmul.f32.gmra.mxu0 %v427
    %v469 = vpop.f32.mrf.mxu0
    %v470 = vadd.f32 0.0, %v469
    %471 = vdwg.mxu0
    %472 = vmatpush.msra.mxu0 %v171
    %473 = vmatpush.msra.mxu0 %v170
    %474 = vmatpush.msra.mxu0 %v169
    %475 = vmatpush.msra.mxu0 %v168
    %476 = vmatpush.msra.mxu0 %v167
    %477 = vmatpush.msra.mxu0 %v166
    %478 = vmatpush.msra.mxu0 %v165
    %479 = vmatpush.msra.mxu0 %v164
    %480 = vmatpush.msra.mxu0 %v163
    %481 = vmatpush.msra.mxu0 %v162
    %482 = vmatpush.msra.mxu0 %v161
    %483 = vmatpush.msra.mxu0 %v160
    %484 = vmatpush.msra.mxu0 %v159
    %485 = vmatpush.msra.mxu0 %v158
    %486 = vmatpush.msra.mxu0 %v157
    %487 = vmatpush.msra.mxu0 %v156
    %488 = vmatmul.f32.gmra.mxu0 %v451
    %v489 = vpop.f32.mrf.mxu0
    %v490 = vadd.f32 %v470, %v489
    %491 = vdwg.mxu0
    %v492 = vadd.f32 %v490, %v113
    %v493 = vtanh.pop %v492
    %s494 = scalar_lea.vmem [#allocation4], 40
    %v495 = vld [vmem:[%s494] sm:$0xff]
    %496 = vmatpush.msra.mxu0 %v133
    %497 = vmatpush.msra.mxu0 %v132
    %498 = vmatpush.msra.mxu0 %v131
    %499 = vmatpush.msra.mxu0 %v130
    %500 = vmatpush.msra.mxu0 %v129
    %501 = vmatpush.msra.mxu0 %v128
    %502 = vmatpush.msra.mxu0 %v127
    %503 = vmatpush.msra.mxu0 %v126
    %504 = vmatpush.msra.mxu0 %v125
    %505 = vmatpush.msra.mxu0 %v124
    %506 = vmatpush.msra.mxu0 %v123
    %507 = vmatpush.msra.mxu0 %v122
    %508 = vmatpush.msra.mxu0 %v121
    %509 = vmatpush.msra.mxu0 %v120
    %510 = vmatpush.msra.mxu0 %v119
    %511 = vmatpush.msra.mxu0 %v118
    %512 = vmatmul.f32.gmra.mxu0 %v451
    %v513 = vpop.f32.mrf.mxu0
    %v514 = vadd.f32 0.0, %v513
    %515 = vdwg.mxu0
    %v516 = vadd.f32 %v495, %v514
    %v517 = vtanh.pop %v516
    %518 = vmatpush.msra.mxu0 %v187
    %519 = vmatpush.msra.mxu0 %v186
    %520 = vmatpush.msra.mxu0 %v185
    %521 = vmatpush.msra.mxu0 %v184
    %522 = vmatpush.msra.mxu0 %v183
    %523 = vmatpush.msra.mxu0 %v182
    %524 = vmatpush.msra.mxu0 %v181
    %525 = vmatpush.msra.mxu0 %v180
    %526 = vmatpush.msra.mxu0 %v179
    %527 = vmatpush.msra.mxu0 %v178
    %528 = vmatpush.msra.mxu0 %v177
    %529 = vmatpush.msra.mxu0 %v176
    %530 = vmatpush.msra.mxu0 %v175
    %531 = vmatpush.msra.mxu0 %v174
    %532 = vmatpush.msra.mxu0 %v173
    %533 = vmatpush.msra.mxu0 %v172
    %534 = vmatmul.f32.gmra.mxu0 %v493
    %v535 = vpop.f32.mrf.mxu0
    %v536 = vadd.f32 0.0, %v535
    %537 = vdwg.mxu0
    %538 = vmatpush.msra.mxu0 %v171
    %539 = vmatpush.msra.mxu0 %v170
    %540 = vmatpush.msra.mxu0 %v169
    %541 = vmatpush.msra.mxu0 %v168
    %542 = vmatpush.msra.mxu0 %v167
    %543 = vmatpush.msra.mxu0 %v166
    %544 = vmatpush.msra.mxu0 %v165
    %545 = vmatpush.msra.mxu0 %v164
    %546 = vmatpush.msra.mxu0 %v163
    %547 = vmatpush.msra.mxu0 %v162
    %548 = vmatpush.msra.mxu0 %v161
    %549 = vmatpush.msra.mxu0 %v160
    %550 = vmatpush.msra.mxu0 %v159
    %551 = vmatpush.msra.mxu0 %v158
    %552 = vmatpush.msra.mxu0 %v157
    %553 = vmatpush.msra.mxu0 %v156
    %554 = vmatmul.f32.gmra.mxu0 %v517
    %v555 = vpop.f32.mrf.mxu0
    %v556 = vadd.f32 %v536, %v555
    %557 = vdwg.mxu0
    %v558 = vadd.f32 %v556, %v113
    %v559 = vtanh.pop %v558
    %s560 = scalar_lea.vmem [#allocation4], 48
    %v561 = vld [vmem:[%s560] sm:$0xff]
    %562 = vmatpush.msra.mxu0 %v133
    %563 = vmatpush.msra.mxu0 %v132
    %564 = vmatpush.msra.mxu0 %v131
    %565 = vmatpush.msra.mxu0 %v130
    %566 = vmatpush.msra.mxu0 %v129
    %567 = vmatpush.msra.mxu0 %v128
    %568 = vmatpush.msra.mxu0 %v127
    %569 = vmatpush.msra.mxu0 %v126
    %570 = vmatpush.msra.mxu0 %v125
    %571 = vmatpush.msra.mxu0 %v124
    %572 = vmatpush.msra.mxu0 %v123
    %573 = vmatpush.msra.mxu0 %v122
    %574 = vmatpush.msra.mxu0 %v121
    %575 = vmatpush.msra.mxu0 %v120
    %576 = vmatpush.msra.mxu0 %v119
    %577 = vmatpush.msra.mxu0 %v118
    %578 = vmatmul.f32.gmra.mxu0 %v517
    %v579 = vpop.f32.mrf.mxu0
    %v580 = vadd.f32 0.0, %v579
    %581 = vdwg.mxu0
    %v582 = vadd.f32 %v561, %v580
    %v583 = vtanh.pop %v582
    %584 = vmatpush.msra.mxu0 %v187
    %585 = vmatpush.msra.mxu0 %v186
    %586 = vmatpush.msra.mxu0 %v185
    %587 = vmatpush.msra.mxu0 %v184
    %588 = vmatpush.msra.mxu0 %v183
    %589 = vmatpush.msra.mxu0 %v182
    %590 = vmatpush.msra.mxu0 %v181
    %591 = vmatpush.msra.mxu0 %v180
    %592 = vmatpush.msra.mxu0 %v179
    %593 = vmatpush.msra.mxu0 %v178
    %594 = vmatpush.msra.mxu0 %v177
    %595 = vmatpush.msra.mxu0 %v176
    %596 = vmatpush.msra.mxu0 %v175
    %597 = vmatpush.msra.mxu0 %v174
    %598 = vmatpush.msra.mxu0 %v173
    %599 = vmatpush.msra.mxu0 %v172
    %600 = vmatmul.f32.gmra.mxu0 %v559
    %v601 = vpop.f32.mrf.mxu0
    %v602 = vadd.f32 0.0, %v601
    %603 = vdwg.mxu0
    %604 = vmatpush.msra.mxu0 %v171
    %605 = vmatpush.msra.mxu0 %v170
    %606 = vmatpush.msra.mxu0 %v169
    %607 = vmatpush.msra.mxu0 %v168
    %608 = vmatpush.msra.mxu0 %v167
    %609 = vmatpush.msra.mxu0 %v166
    %610 = vmatpush.msra.mxu0 %v165
    %611 = vmatpush.msra.mxu0 %v164
    %612 = vmatpush.msra.mxu0 %v163
    %613 = vmatpush.msra.mxu0 %v162
    %614 = vmatpush.msra.mxu0 %v161
    %615 = vmatpush.msra.mxu0 %v160
    %616 = vmatpush.msra.mxu0 %v159
    %617 = vmatpush.msra.mxu0 %v158
    %618 = vmatpush.msra.mxu0 %v157
    %619 = vmatpush.msra.mxu0 %v156
    %620 = vmatmul.f32.gmra.mxu0 %v583
    %v621 = vpop.f32.mrf.mxu0
    %v622 = vadd.f32 %v602, %v621
    %623 = vdwg.mxu0
    %v624 = vadd.f32 %v622, %v113
    %v625 = vtanh.pop %v624
    %s626 = scalar_lea.vmem [#allocation4], 56
    %v627 = vld [vmem:[%s626] sm:$0xff]
    %628 = vmatpush.msra.mxu0 %v133
    %629 = vmatpush.msra.mxu0 %v132
    %630 = vmatpush.msra.mxu0 %v131
    %631 = vmatpush.msra.mxu0 %v130
    %632 = vmatpush.msra.mxu0 %v129
    %633 = vmatpush.msra.mxu0 %v128
    %634 = vmatpush.msra.mxu0 %v127
    %635 = vmatpush.msra.mxu0 %v126
    %636 = vmatpush.msra.mxu0 %v125
    %637 = vmatpush.msra.mxu0 %v124
    %638 = vmatpush.msra.mxu0 %v123
    %639 = vmatpush.msra.mxu0 %v122
    %640 = vmatpush.msra.mxu0 %v121
    %641 = vmatpush.msra.mxu0 %v120
    %642 = vmatpush.msra.mxu0 %v119
    %643 = vmatpush.msra.mxu0 %v118
    %644 = vmatmul.f32.gmra.mxu0 %v583
    %v645 = vpop.f32.mrf.mxu0
    %v646 = vadd.f32 0.0, %v645
    %647 = vdwg.mxu0
    %v648 = vadd.f32 %v627, %v646
    %v649 = vtanh.pop %v648
    %650 = vmatpush.msra.mxu0 %v187
    %651 = vmatpush.msra.mxu0 %v186
    %652 = vmatpush.msra.mxu0 %v185
    %653 = vmatpush.msra.mxu0 %v184
    %654 = vmatpush.msra.mxu0 %v183
    %655 = vmatpush.msra.mxu0 %v182
    %656 = vmatpush.msra.mxu0 %v181
    %657 = vmatpush.msra.mxu0 %v180
    %658 = vmatpush.msra.mxu0 %v179
    %659 = vmatpush.msra.mxu0 %v178
    %660 = vmatpush.msra.mxu0 %v177
    %661 = vmatpush.msra.mxu0 %v176
    %662 = vmatpush.msra.mxu0 %v175
    %663 = vmatpush.msra.mxu0 %v174
    %664 = vmatpush.msra.mxu0 %v173
    %665 = vmatpush.msra.mxu0 %v172
    %666 = vmatmul.f32.gmra.mxu0 %v625
    %v667 = vpop.f32.mrf.mxu0
    %v668 = vadd.f32 0.0, %v667
    %669 = vdwg.mxu0
    %670 = vmatpush.msra.mxu0 %v171
    %671 = vmatpush.msra.mxu0 %v170
    %672 = vmatpush.msra.mxu0 %v169
    %673 = vmatpush.msra.mxu0 %v168
    %674 = vmatpush.msra.mxu0 %v167
    %675 = vmatpush.msra.mxu0 %v166
    %676 = vmatpush.msra.mxu0 %v165
    %677 = vmatpush.msra.mxu0 %v164
    %678 = vmatpush.msra.mxu0 %v163
    %679 = vmatpush.msra.mxu0 %v162
    %680 = vmatpush.msra.mxu0 %v161
    %681 = vmatpush.msra.mxu0 %v160
    %682 = vmatpush.msra.mxu0 %v159
    %683 = vmatpush.msra.mxu0 %v158
    %684 = vmatpush.msra.mxu0 %v157
    %685 = vmatpush.msra.mxu0 %v156
    %686 = vmatmul.f32.gmra.mxu0 %v649
    %v687 = vpop.f32.mrf.mxu0
    %v688 = vadd.f32 %v668, %v687
    %689 = vdwg.mxu0
    %v690 = vadd.f32 %v688, %v113
    %v691 = vtanh.pop %v690
    %692 = vst [vmem:[#allocation2] sm:$0xff] %v649
    %693 = vst [vmem:[#allocation3] sm:$0xff] %v691
    // Predicated region
    $region54: #{tpu_custom_call.1} parent=1 // pred_check
      %p694 = pneg %p105
    $region55: #{tpu_custom_call.1} parent=1 // pred_check_branch
      %696 = sbr.rel (%p694) target = $region57
    $region56: #{tpu_custom_call.1} parent=1 // pred_region
      %v697 = vld [vmem:[#allocation12] sm:$0xff]
      %v698 = vld [vmem:[#allocation12 + $0x8] sm:$0xff]
      %v699 = vld [vmem:[#allocation12 + $0x10] sm:$0xff]
      %v700 = vld [vmem:[#allocation12 + $0x18] sm:$0xff]
      %v701 = vld [vmem:[#allocation12 + $0x20] sm:$0xff]
      %v702 = vld [vmem:[#allocation12 + $0x28] sm:$0xff]
      %v703 = vld [vmem:[#allocation12 + $0x30] sm:$0xff]
      %v704 = vld [vmem:[#allocation12 + $0x38] sm:$0xff]
      %v705 = vld [vmem:[#allocation12 + $0x40] sm:$0xff]
      %v706 = vld [vmem:[#allocation12 + $0x48] sm:$0xff]
      %v707 = vld [vmem:[#allocation12 + $0x50] sm:$0xff]
      %v708 = vld [vmem:[#allocation12 + $0x58] sm:$0xff]
      %v709 = vld [vmem:[#allocation12 + $0x60] sm:$0xff]
      %v710 = vld [vmem:[#allocation12 + $0x68] sm:$0xff]
      %v711 = vld [vmem:[#allocation12 + $0x70] sm:$0xff]
      %v712 = vld [vmem:[#allocation12 + $0x78] sm:$0xff]
      %v713 = vld [vmem:[%s6] sm:$0x1]
      %v715 = vperm.slane %v713, 0
      %717 = vmatpush.msra.mxu0 %v712
      %718 = vmatpush.msra.mxu0 %v711
      %719 = vmatpush.msra.mxu0 %v710
      %720 = vmatpush.msra.mxu0 %v709
      %721 = vmatpush.msra.mxu0 %v708
      %722 = vmatpush.msra.mxu0 %v707
      %723 = vmatpush.msra.mxu0 %v706
      %724 = vmatpush.msra.mxu0 %v705
      %725 = vmatpush.msra.mxu0 %v704
      %726 = vmatpush.msra.mxu0 %v703
      %727 = vmatpush.msra.mxu0 %v702
      %728 = vmatpush.msra.mxu0 %v701
      %729 = vmatpush.msra.mxu0 %v700
      %730 = vmatpush.msra.mxu0 %v699
      %731 = vmatpush.msra.mxu0 %v698
      %732 = vmatpush.msra.mxu0 %v697
      %733 = vmatmul.f32.gmra.mxu0 %v691
      %v734 = vpop.f32.mrf.mxu0
      %v735 = vadd.f32 %v715, %v734
      %736 = vdwg.mxu0
      %737 = vst [vmem:[#allocation13] sm:$0xff] %v735
    $region57: #{tpu_custom_call.1} parent=1 // pred_fallthru
      _
    // Predicated region
    $region58: #{tpu_custom_call.1} parent=1 // pred_check
      _
    $region59: #{tpu_custom_call.1} parent=1 // pred_check_branch
      %739 = sbr.rel (0) target = $region61
    $region60: #{tpu_custom_call.1} parent=1 // pred_region
      %741 = vsyncadd [#allocation6], 0
      %s743 = sshll.u32 [#allocation13], 4
      %s744 = int_to_ptr.vmem [resolvable:$true] %s743
      %s745 = sshll.u32 %s7, 4
      %s746 = int_to_ptr.hbm [resolvable:$true] %s745
      %748 = dma.vmem_to_hbm [thread:$0]  %s744, 128, %s746, [#allocation6]
    $region61: #{tpu_custom_call.1} parent=1 // pred_fallthru
      _
    // Predicated region
    $region62: #{tpu_custom_call.1} parent=1 // pred_check
      _
    $region63: #{tpu_custom_call.1} parent=1 // pred_check_branch
      %750 = sbr.rel (0) target = $region65
    $region64: #{tpu_custom_call.1} parent=1 // pred_region
      %752 = dma.done [#allocation6], 128
    $region65: #{tpu_custom_call.1} parent=1 // pred_fallthru
      _
    %753 = vsyncpa [#allocation5], 1
    %754 = vsyncpa [#allocation8], 1
    %755 = vsyncpa [#allocation11], 1
    %756 = vsyncpa [#allocation6], 1

</llo_original>
